<compile_context>
chip_gen: v6e
topology: v6e:2x2x1
jax: 0.10.0
libtpu: 0.0.40
codegen_flags: <defaults>
</compile_context>

<pallas_src>
import functools

import jax
import jax.numpy as jnp
from jax.experimental import pallas as pl
from jax.experimental.pallas import tpu as pltpu


# ----------------------------------------------------------------------------
# Pallas kernels
# ----------------------------------------------------------------------------
def _mm_kernel(x_ref, w_ref, b_ref, o_ref, acc_ref, *, apply_relu):
    """K-tiled fused (im2col-conv + folded BN bias + optional ReLU), f32 accumulation."""
    @pl.when(pl.program_id(2) == 0)
    def _():
        acc_ref[...] = jnp.zeros_like(acc_ref)

    acc_ref[...] += jnp.dot(x_ref[...], w_ref[...], preferred_element_type=jnp.float32)

    @pl.when(pl.program_id(2) == pl.num_programs(2) - 1)
    def _():
        out = acc_ref[...] + b_ref[...].astype(jnp.float32)
        if apply_relu:
            out = jnp.maximum(out, 0.0)
        o_ref[...] = out.astype(o_ref.dtype)


def _mm_res_kernel(x_ref, w_ref, b_ref, r_ref, o_ref, acc_ref, *, apply_relu):
    """Same as _mm_kernel plus a residual add before the ReLU."""
    @pl.when(pl.program_id(2) == 0)
    def _():
        acc_ref[...] = jnp.zeros_like(acc_ref)

    acc_ref[...] += jnp.dot(x_ref[...], w_ref[...], preferred_element_type=jnp.float32)

    @pl.when(pl.program_id(2) == pl.num_programs(2) - 1)
    def _():
        out = acc_ref[...] + b_ref[...].astype(jnp.float32) + r_ref[...].astype(jnp.float32)
        if apply_relu:
            out = jnp.maximum(out, 0.0)
        o_ref[...] = out.astype(o_ref.dtype)


def _max9_kernel(x_ref, o_ref):
    """Max over the 9 shifted views of a 3x3 max-pool window."""
    o_ref[...] = jnp.max(x_ref[...], axis=0)


def _avgpool_kernel(x_ref, o_ref):
    """Global average pool over the spatial axis (axis=1), f32 accumulation."""
    o_ref[...] = jnp.mean(x_ref[...].astype(jnp.float32), axis=1)


# ----------------------------------------------------------------------------
# Pallas wrappers
# ----------------------------------------------------------------------------
_VMEM_LIMIT = 32 * 1024 * 1024  # safe on v5e/v6e (128 MiB) and v7x (64 MiB)


def _round_up(x, m):
    return ((x + m - 1) // m) * m


def _choose_tk(k):
    """K tile: keep full K for small/odd K, otherwise a lane-aligned divisor."""
    if k <= 1152:
        return k
    for cand in (1152, 1024, 768, 512, 384, 256, 128):
        if k % cand == 0:
            return cand
    return k


@functools.partial(jax.jit, static_argnames=("relu",))
def fused_matmul(x, w, b, res=None, *, relu):
    """x:(M,K) bf16 @ w:(K,Cout) bf16 + b:(1,Cout) f32 [+ res:(M,Cout) bf16], ReLU?, -> bf16."""
    M, K = x.shape
    Cout = w.shape[1]

    # Row tile: only pad M to a multiple of 8 (not 128) when M is small.
    TM = min(128, _round_up(M, 8))
    Mp = _round_up(M, TM)
    # Cout tile: lane-dense and >1 parallel step on wide layers (feeds both v7x TCs).
    TN = Cout if Cout <= 256 else 256
    TK = _choose_tk(K)
    gm, gn, gk = Mp // TM, Cout // TN, K // TK

    x_p = x if Mp == M else jnp.pad(x, ((0, Mp - M), (0, 0)))

    in_specs = [
        pl.BlockSpec((TM, TK), lambda i, j, k: (i, k)),
        pl.BlockSpec((TK, TN), lambda i, j, k: (k, j)),
        pl.BlockSpec((1, TN), lambda i, j, k: (0, j)),
    ]
    args = [x_p, w, b]
    if res is not None:
        r_p = res if Mp == M else jnp.pad(res, ((0, Mp - M), (0, 0)))
        in_specs.append(pl.BlockSpec((TM, TN), lambda i, j, k: (i, j)))
        args.append(r_p)
        kernel = functools.partial(_mm_res_kernel, apply_relu=relu)
    else:
        kernel = functools.partial(_mm_kernel, apply_relu=relu)

    out = pl.pallas_call(
        kernel,
        out_shape=jax.ShapeDtypeStruct((Mp, Cout), jnp.bfloat16),
        grid=(gm, gn, gk),
        in_specs=in_specs,
        out_specs=pl.BlockSpec((TM, TN), lambda i, j, k: (i, j)),
        scratch_shapes=[pltpu.VMEM((TM, TN), jnp.float32)],
        compiler_params=pltpu.CompilerParams(
            dimension_semantics=("parallel", "parallel", "arbitrary"),
            vmem_limit_bytes=_VMEM_LIMIT,
        ),
    )(*args)
    return out[:M]


@functools.partial(jax.jit, static_argnames=("k", "stride", "pad", "relu"))
def conv_bn(x, w_flat, b, *, k, stride, pad, relu, residual=None):
    """Conv(kxk, stride, pad) + folded BN (+ residual + ReLU).  x is NHWC bf16."""
    N, H, W, C = x.shape
    Cout = w_flat.shape[1]
    Ho = (H + 2 * pad - k) // stride + 1
    Wo = (W + 2 * pad - k) // stride + 1

    if k == 1 and pad == 0:
        patches = x[:, ::stride, ::stride, :].reshape(N * Ho * Wo, C)
    else:
        xp = jnp.pad(x, ((0, 0), (pad, pad), (pad, pad), (0, 0)))
        cols = []
        for ky in range(k):
            for kx in range(k):
                cols.append(
                    xp[:, ky:ky + stride * (Ho - 1) + 1:stride,
                           kx:kx + stride * (Wo - 1) + 1:stride, :]
                )
        patches = jnp.stack(cols, axis=3).reshape(N * Ho * Wo, k * k * C)

    res = None if residual is None else residual.reshape(N * Ho * Wo, Cout)
    out = fused_matmul(patches, w_flat, b.reshape(1, Cout), res, relu=relu)
    return out.reshape(N, Ho, Wo, Cout)


@jax.jit
def maxpool_3x3_s2(x):
    """MaxPool2d(kernel=3, stride=2, padding=1) on NHWC via a tiled 9-way Pallas max-reduce."""
    N, H, W, C = x.shape
    Ho = (H + 2 - 3) // 2 + 1
    Wo = (W + 2 - 3) // 2 + 1
    xp = jnp.pad(x, ((0, 0), (1, 1), (1, 1), (0, 0)), constant_values=-jnp.inf)
    cols = [
        xp[:, ky:ky + 2 * (Ho - 1) + 1:2, kx:kx + 2 * (Wo - 1) + 1:2, :]
        for ky in range(3) for kx in range(3)
    ]
    M = N * Ho * Wo
    stacked = jnp.stack(cols, axis=0).reshape(9, M, C)

    TR = min(512, _round_up(M, 8))
    Mp = _round_up(M, TR)
    if Mp != M:
        stacked = jnp.pad(stacked, ((0, 0), (0, Mp - M), (0, 0)))

    out = pl.pallas_call(
        _max9_kernel,
        out_shape=jax.ShapeDtypeStruct((Mp, C), x.dtype),
        grid=(Mp // TR,),
        in_specs=[pl.BlockSpec((9, TR, C), lambda i: (0, i, 0))],
        out_specs=pl.BlockSpec((TR, C), lambda i: (i, 0)),
        compiler_params=pltpu.CompilerParams(
            dimension_semantics=("parallel",),
            vmem_limit_bytes=_VMEM_LIMIT,
        ),
    )(stacked)
    return out[:M].reshape(N, Ho, Wo, C)


@jax.jit
def global_avgpool(x):
    """AdaptiveAvgPool2d((1,1)) on NHWC -> (N, C) f32, tiled over channels."""
    N, H, W, C = x.shape
    xr = x.reshape(N, H * W, C)
    TC = 512 if C % 512 == 0 else C
    return pl.pallas_call(
        _avgpool_kernel,
        out_shape=jax.ShapeDtypeStruct((N, C), jnp.float32),
        grid=(C // TC,),
        in_specs=[pl.BlockSpec((N, H * W, TC), lambda i: (0, 0, i))],
        out_specs=pl.BlockSpec((N, TC), lambda i: (0, i)),
        compiler_params=pltpu.CompilerParams(
            dimension_semantics=("parallel",),
            vmem_limit_bytes=_VMEM_LIMIT,
        ),
    )(xr)


# ----------------------------------------------------------------------------
# Deterministic parameter construction (ResNet-101, BN folded into conv, bf16 weights)
# ----------------------------------------------------------------------------
def _init_conv_bn(key, k, cin, cout):
    k1, k2, k3, k4, k5 = jax.random.split(key, 5)
    w = jax.random.normal(k1, (k, k, cin, cout), jnp.float32) * jnp.sqrt(2.0 / (k * k * cin))
    gamma = jax.random.uniform(k2, (cout,), minval=0.8, maxval=1.2)
    beta = jax.random.normal(k3, (cout,)) * 0.05
    mean = jax.random.normal(k4, (cout,)) * 0.05
    var = jax.random.uniform(k5, (cout,), minval=0.8, maxval=1.2)
    scale = gamma / jnp.sqrt(var + 1e-5)
    # rows ordered (ky, kx, cin) -- matches the im2col patch layout
    w_folded = (w * scale).reshape(k * k * cin, cout).astype(jnp.bfloat16)
    b_folded = (beta - mean * scale).astype(jnp.float32)
    return w_folded, b_folded


def build_resnet101_params(key):
    keys = iter(jax.random.split(key, 256))
    params = {"conv1": _init_conv_bn(next(keys), 7, 3, 64)}
    # (planes, num_blocks, stride) for layer1..layer4 of ResNet-101
    cfg = [(64, 3, 1), (128, 4, 2), (256, 23, 2), (512, 3, 2)]
    inplanes = 64
    layers = []
    for planes, nblocks, stride in cfg:
        blocks = []
        for bi in range(nblocks):
            s = stride if bi == 0 else 1
            blk = {
                "conv1": _init_conv_bn(next(keys), 1, inplanes, planes),
                "conv2": _init_conv_bn(next(keys), 3, planes, planes),
                "conv3": _init_conv_bn(next(keys), 1, planes, planes * 4),
            }
            if bi == 0:  # projection shortcut (stride and/or channel change)
                blk["down"] = _init_conv_bn(next(keys), 1, inplanes, planes * 4)
            blocks.append((blk, s))
            inplanes = planes * 4
        layers.append(blocks)
    params["layers"] = layers
    return params


# ----------------------------------------------------------------------------
# Forward pass (matches torchvision resnet101 children()[:-1])
# ----------------------------------------------------------------------------
def bottleneck(x, blk, stride):
    identity = x
    out = conv_bn(x, *blk["conv1"], k=1, stride=1, pad=0, relu=True)
    out = conv_bn(out, *blk["conv2"], k=3, stride=stride, pad=1, relu=True)
    if "down" in blk:
        identity = conv_bn(x, *blk["down"], k=1, stride=stride, pad=0, relu=False)
    # conv3 + BN, then residual add, then ReLU — fused in one Pallas call.
    out = conv_bn(out, *blk["conv3"], k=1, stride=1, pad=0, relu=True, residual=identity)
    return out


def feature_extractor(params, x_nchw):
    x = jnp.transpose(x_nchw, (0, 2, 3, 1)).astype(jnp.bfloat16)          # NCHW -> NHWC bf16
    x = conv_bn(x, *params["conv1"], k=7, stride=2, pad=3, relu=True)     # conv1+bn1+relu
    x = maxpool_3x3_s2(x)                                                 # maxpool
    for blocks in params["layers"]:                                       # layer1..layer4
        for blk, s in blocks:
            x = bottleneck(x, blk, s)
    feats = global_avgpool(x)                                             # (N, 2048) f32
    return feats[:, :, None, None]                                        # (N, 2048, 1, 1), NCHW


# ----------------------------------------------------------------------------
if __name__ == "__main__":
    key = jax.random.PRNGKey(0)
    k_in, k_par = jax.random.split(key)

    # Small input consistent with a ResNet feature extractor: N=2, 3 channels, 64x64.
    x = jax.random.normal(k_in, (2, 3, 64, 64), jnp.float32)

    params = build_resnet101_params(k_par)

    out = feature_extractor(params, x)
    out = jax.block_until_ready(out)

    assert out.shape == (2, 2048, 1, 1), out.shape
    assert out.dtype == jnp.float32
    assert bool(jnp.all(jnp.isfinite(out)))
    print("KERNEL_OK")
</pallas_src>

<mosaic_0001>
module attributes {stable_mosaic.version = 11 : i64} {
  func.func @_mm_kernel(%arg0: i32, %arg1: i32, %arg2: i32, %arg3: memref<128x147xbf16, #tpu.memory_space<vmem>>, %arg4: memref<147x64xbf16, #tpu.memory_space<vmem>>, %arg5: memref<1x64xf32, #tpu.memory_space<vmem>>, %arg6: memref<128x64xbf16, #tpu.memory_space<vmem>>, %arg7: memref<128x64xf32, #tpu.memory_space<vmem>>) attributes {dimension_semantics = [#tpu.dimension_semantics<parallel>, #tpu.dimension_semantics<parallel>, #tpu.dimension_semantics<arbitrary>], iteration_bounds = array<i64: 16, 1, 1>, scalar_prefetch = 0 : i64, scratch_operands = 1 : i64, tpu.core_type = #tpu.core_type<tc>, window_params = [{transform_indices = @transform_0, window_bounds = array<i64: 128, 147>}, {transform_indices = @transform_1, window_bounds = array<i64: 147, 64>}, {transform_indices = @transform_2, window_bounds = array<i64: 1, 64>}, {transform_indices = @transform_3, window_bounds = array<i64: 128, 64>}]} {
    %c0_i32 = arith.constant 0 : i32
    %0 = arith.cmpi eq, %arg2, %c0_i32 : i32
    %1 = arith.extui %0 : i1 to i32
    %c0_i32_0 = arith.constant 0 : i32
    %2 = arith.cmpi ne, %1, %c0_i32_0 : i32
    scf.if %2 {
      %cst_10 = arith.constant 0.000000e+00 : f32
      %12 = vector.broadcast %cst_10 : f32 to vector<128x64xf32>
      %c0_11 = arith.constant 0 : index
      %c0_12 = arith.constant 0 : index
      %13 = vector.load %arg7[%c0_11, %c0_12] : memref<128x64xf32, #tpu.memory_space<vmem>>, vector<128x64xf32>
      tpu.vector_store %arg7[%c0_11, %c0_12], %12 {strides = array<i32>} : memref<128x64xf32, #tpu.memory_space<vmem>>, vector<128x64xf32>,
    } else {
    }
    %c0 = arith.constant 0 : index
    %c0_1 = arith.constant 0 : index
    %3 = vector.load %arg7[%c0, %c0_1] : memref<128x64xf32, #tpu.memory_space<vmem>>, vector<128x64xf32>
    %c0_2 = arith.constant 0 : index
    %c0_3 = arith.constant 0 : index
    %4 = vector.load %arg3[%c0_2, %c0_3] : memref<128x147xbf16, #tpu.memory_space<vmem>>, vector<128x147xbf16>
    %c0_4 = arith.constant 0 : index
    %c0_5 = arith.constant 0 : index
    %5 = vector.load %arg4[%c0_4, %c0_5] : memref<147x64xbf16, #tpu.memory_space<vmem>>, vector<147x64xbf16>
    %cst = arith.constant dense<0.000000e+00> : vector<128x64xf32>
    %6 = tpu.matmul %4, %5, %cst {dimension_numbers = #tpu.dot_dimension_numbers<[1], [0], [0], [1], [0, 0, 1, 1], [], []>} : vector<128x147xbf16>, vector<147x64xbf16>, vector<128x64xf32> -> vector<128x64xf32>
    %7 = arith.addf %3, %6 : vector<128x64xf32>
    %c0_6 = arith.constant 0 : index
    %c0_7 = arith.constant 0 : index
    %8 = vector.load %arg7[%c0_6, %c0_7] : memref<128x64xf32, #tpu.memory_space<vmem>>, vector<128x64xf32>
    tpu.vector_store %arg7[%c0_6, %c0_7], %7 {strides = array<i32>} : memref<128x64xf32, #tpu.memory_space<vmem>>, vector<128x64xf32>,
    %c0_i32_8 = arith.constant 0 : i32
    %9 = arith.cmpi eq, %arg2, %c0_i32_8 : i32
    %10 = arith.extui %9 : i1 to i32
    %c0_i32_9 = arith.constant 0 : i32
    %11 = arith.cmpi ne, %10, %c0_i32_9 : i32
    scf.if %11 {
      %c0_10 = arith.constant 0 : index
      %c0_11 = arith.constant 0 : index
      %12 = vector.load %arg7[%c0_10, %c0_11] : memref<128x64xf32, #tpu.memory_space<vmem>>, vector<128x64xf32>
      %c0_12 = arith.constant 0 : index
      %c0_13 = arith.constant 0 : index
      %13 = vector.load %arg5[%c0_12, %c0_13] : memref<1x64xf32, #tpu.memory_space<vmem>>, vector<1x64xf32>
      %14 = vector.broadcast %13 : vector<1x64xf32> to vector<128x64xf32>
      %15 = arith.addf %12, %14 : vector<128x64xf32>
      %cst_14 = arith.constant 0.000000e+00 : f32
      %16 = vector.broadcast %cst_14 : f32 to vector<128x64xf32>
      %17 = arith.maximumf %15, %16 : vector<128x64xf32>
      %18 = arith.truncf %17 : vector<128x64xf32> to vector<128x64xbf16>
      %c0_15 = arith.constant 0 : index
      %c0_16 = arith.constant 0 : index
      %19 = vector.load %arg6[%c0_15, %c0_16] : memref<128x64xbf16, #tpu.memory_space<vmem>>, vector<128x64xbf16>
      tpu.vector_store %arg6[%c0_15, %c0_16], %18 {strides = array<i32>} : memref<128x64xbf16, #tpu.memory_space<vmem>>, vector<128x64xbf16>,
    } else {
    }
    return
  }
  func.func @transform_0(%arg0: i32, %arg1: i32, %arg2: i32) -> (i32, i32) {
    %c0_i32 = arith.constant 0 : i32
    return %arg0, %arg2 : i32, i32
  }
  func.func @transform_1(%arg0: i32, %arg1: i32, %arg2: i32) -> (i32, i32) {
    %c0_i32 = arith.constant 0 : i32
    return %arg2, %arg1 : i32, i32
  }
  func.func @transform_2(%arg0: i32, %arg1: i32, %arg2: i32) -> (i32, i32) {
    %c0_i32 = arith.constant 0 : i32
    %c0_i32_0 = arith.constant 0 : i32
    return %c0_i32, %arg1 : i32, i32
  }
  func.func @transform_3(%arg0: i32, %arg1: i32, %arg2: i32) -> (i32, i32) {
    %c0_i32 = arith.constant 0 : i32
    return %arg0, %arg1 : i32, i32
  }
}

</mosaic_0001>

<llo_original>
// kernel: fused_matmul.1
$region0: #{fused_matmul.1}
  #allocation0 [shape = 'u32[]', space=smem, size = 0x4, offset = 0x4, fixed_abs, tag = 'smem constant byte address 0x4 - core index']
  #allocation1 [shape = 'u32[144,128]{1,0:T(1,128)}', space=vmem, size = 0x12000, scoped, tag = 'internal scratch']
  #allocation2 [shape = 'f32[128,64]{1,0:T(8,128)}', space=vmem, size = 0x10000, scoped, tag = 'scratch operand']
  %s0 = inlined_call_operand.vmem [shape: bf16[2048,147], index: 0, kind: input, shape index: {}]
  %s1 = inlined_call_operand.vmem [shape: bf16[147,64], index: 1, kind: input, shape index: {}]
  %s2 = inlined_call_operand.vmem [shape: f32[1,64], index: 2, kind: input, shape index: {}]
  %s3 = inlined_call_operand.vmem [shape: bf16[2048,64], index: 3, kind: output, shape index: {}]
  %s4 = sld [smem:[#allocation0]]
  $region53: #{fused_matmul.1} parent=0
    _
  %s6 = ssub.s32 1, %s4
  %s7 = scalar_select 0, %s6, %s4
  loop: start=0, step=1, limit=18
  $region2: #{fused_matmul.1} parent=0 // loop_pre_header
    _
  $region3: #{fused_matmul.1} parent=0 // loop_header
    %s9 = sphi 0, %s13
    %p10 = scmp.ge.s32.totalorder %s9, 18
    %s16 = sphi 0, %s35
    %s17 = sphi 0, %s31
    %s18 = sphi 0, %s27
    %s19 = sphi 0, %s16
    %s20 = sphi 0, %s17
    %s21 = sphi 0, %s18
    %s22 = sphi 0, %s19
    %s23 = sphi 0, %s20
    %s24 = sphi 0, %s21
    %s40 = sphi 0, %s42
    %s43 = sphi 0, %s40
    %s44 = sphi 0, %s43
    %s60 = sphi 0, %s44
    %s68 = sphi 0, %s70
    %s71 = sphi 0, %s68
    %s72 = sphi 0, %s71
    %s88 = sphi 0, %s72
    %s94 = sphi 0, %s96
    %s97 = sphi 0, %s94
    %s98 = sphi 0, %s97
    %s114 = sphi 0, %s98
    %s122 = sphi 0, %s124
    %s125 = sphi 0, %s122
    %s126 = sphi 0, %s125
    %s142 = sphi 0, %s126
  $region4: #{fused_matmul.1} parent=0 // loop_header_branch
    %12 = sbr.rel (%p10) target = $region8
  $region5: #{fused_matmul.1} parent=0 // loop_body
    %s14 = ssub.s32 %s9, 1
    %s15 = ssub.s32 %s9, 2
    %s25 = sadd.s32 1, %s18
    %p26 = scmp.ge.s32.totalorder %s25, 1
    %s27 = scalar_select %p26, 0, %s25
    %s28 = sadd.s32 1, %s17
    %s29 = scalar_select %p26, %s28, %s17
    %p30 = scmp.ge.s32.totalorder %s29, 1
    %s31 = scalar_select %p30, 0, %s29
    %s32 = sadd.s32 1, %s16
    %s33 = scalar_select %p30, %s32, %s16
    %p34 = scmp.ge.s32.totalorder %s33, 16
    %s35 = scalar_select %p34, 0, %s33
    %s36 = ssub.s32 %s16, %s35
    %s37 = ssub.s32 %s18, %s27
    %s38 = sor.u32 %s36, %s37
    %p39 = scmp.eq.s32.totalorder %s38, 0
    %s41 = sadd.s32 %s40, 1
    %s42 = scalar_select %p39, %s40, %s41
    %p45 = pneg %p39
    %p46 = scmp.eq.s32.totalorder %s9, 15
    %p47 = por %p45, %p46
    %p48 = scmp.ne.s32.totalorder %s40, %s43
    %p49 = scmp.eq.s32.totalorder %s9, 0
    %p50 = por %p48, %p49
    %p51 = scmp.ne.s32.totalorder %s40, %s43
    %p52 = scmp.eq.s32.totalorder %s14, 15
    %p53 = por %p51, %p52
    %p54 = scmp.ne.s32.totalorder %s43, %s44
    %p55 = scmp.eq.s32.totalorder %s14, 0
    %p56 = por %p54, %p55
    %p57 = scmp.ne.s32.totalorder %s43, %s44
    %p58 = scmp.eq.s32.totalorder %s15, 15
    %p59 = por %p57, %p58
    %p61 = scmp.ne.s32.totalorder %s44, %s60
    %p62 = scmp.eq.s32.totalorder %s15, 0
    %p63 = por %p61, %p62
    %s64 = ssub.s32 %s18, %s27
    %s65 = ssub.s32 %s17, %s31
    %s66 = sor.u32 %s64, %s65
    %p67 = scmp.eq.s32.totalorder %s66, 0
    %s69 = sadd.s32 %s68, 1
    %s70 = scalar_select %p67, %s68, %s69
    %p73 = pneg %p67
    %p74 = scmp.eq.s32.totalorder %s9, 15
    %p75 = por %p73, %p74
    %p76 = scmp.ne.s32.totalorder %s68, %s71
    %p77 = scmp.eq.s32.totalorder %s9, 0
    %p78 = por %p76, %p77
    %p79 = scmp.ne.s32.totalorder %s68, %s71
    %p80 = scmp.eq.s32.totalorder %s14, 15
    %p81 = por %p79, %p80
    %p82 = scmp.ne.s32.totalorder %s71, %s72
    %p83 = scmp.eq.s32.totalorder %s14, 0
    %p84 = por %p82, %p83
    %p85 = scmp.ne.s32.totalorder %s71, %s72
    %p86 = scmp.eq.s32.totalorder %s15, 15
    %p87 = por %p85, %p86
    %p89 = scmp.ne.s32.totalorder %s72, %s88
    %p90 = scmp.eq.s32.totalorder %s15, 0
    %p91 = por %p89, %p90
    %s92 = ssub.s32 %s17, %s31
    %p93 = scmp.eq.s32.totalorder %s92, 0
    %s95 = sadd.s32 %s94, 1
    %s96 = scalar_select %p93, %s94, %s95
    %p99 = pneg %p93
    %p100 = scmp.eq.s32.totalorder %s9, 15
    %p101 = por %p99, %p100
    %p102 = scmp.ne.s32.totalorder %s94, %s97
    %p103 = scmp.eq.s32.totalorder %s9, 0
    %p104 = por %p102, %p103
    %p105 = scmp.ne.s32.totalorder %s94, %s97
    %p106 = scmp.eq.s32.totalorder %s14, 15
    %p107 = por %p105, %p106
    %p108 = scmp.ne.s32.totalorder %s97, %s98
    %p109 = scmp.eq.s32.totalorder %s14, 0
    %p110 = por %p108, %p109
    %p111 = scmp.ne.s32.totalorder %s97, %s98
    %p112 = scmp.eq.s32.totalorder %s15, 15
    %p113 = por %p111, %p112
    %p115 = scmp.ne.s32.totalorder %s98, %s114
    %p116 = scmp.eq.s32.totalorder %s15, 0
    %p117 = por %p115, %p116
    %s118 = ssub.s32 %s16, %s35
    %s119 = ssub.s32 %s17, %s31
    %s120 = sor.u32 %s118, %s119
    %p121 = scmp.eq.s32.totalorder %s120, 0
    %s123 = sadd.s32 %s122, 1
    %s124 = scalar_select %p121, %s122, %s123
    %p127 = pneg %p121
    %p128 = scmp.eq.s32.totalorder %s9, 15
    %p129 = por %p127, %p128
    %p130 = scmp.ne.s32.totalorder %s122, %s125
    %p131 = scmp.eq.s32.totalorder %s9, 0
    %p132 = por %p130, %p131
    %p133 = scmp.ne.s32.totalorder %s122, %s125
    %p134 = scmp.eq.s32.totalorder %s14, 15
    %p135 = por %p133, %p134
    %p136 = scmp.ne.s32.totalorder %s125, %s126
    %p137 = scmp.eq.s32.totalorder %s14, 0
    %p138 = por %p136, %p137
    %p139 = scmp.ne.s32.totalorder %s125, %s126
    %p140 = scmp.eq.s32.totalorder %s15, 15
    %p141 = por %p139, %p140
    %p143 = scmp.ne.s32.totalorder %s126, %s142
    %p144 = scmp.eq.s32.totalorder %s15, 0
    %p145 = por %p143, %p144
    %p146 = scmp.le.s32.totalorder 1, %s9
    %p147 = scmp.lt.s32.totalorder %s9, 17
    %p148 = pnand %p146, %p147
    %p149 = pneg %p148
    // Predicated region
    $region9: #{fused_matmul.1} parent=5 // pred_check
      _
    $region10: #{fused_matmul.1} parent=5 // pred_check_branch
      %151 = sbr.rel (%p148) target = $region12
    $region11: #{fused_matmul.1} parent=5 // pred_region
      %s152 = ssub.s32 %s9, 1
      // Predicated region
      $region13: #{fused_matmul.1} parent=11 // pred_check
        %p153 = pneg %p84
      $region14: #{fused_matmul.1} parent=11 // pred_check_branch
        %155 = sbr.rel (%p153) target = $region16
      $region15: #{fused_matmul.1} parent=11 // pred_region
        %s156 = smul.u32 19, %s21
        %p157 = scmp.lt.s32.totalorder %s156, 18
        %s158 = scalar_select %p157, %s156, 18
        %p159 = scmp.lt.s32.totalorder %s20, 0
        %s160 = scalar_select %p159, %s20, 0
        %s161 = sadd.s32 %s160, %s158
        %s162 = smul.addr %s161, 4
        %s163 = scalar_lea.vmem %s1, %s162
        %s164 = smul.u32 19, %s21
      $region16: #{fused_matmul.1} parent=11 // pred_fallthru
        _
      // Predicated region
      $region17: #{fused_matmul.1} parent=11 // pred_check
        %p165 = pneg %p110
      $region18: #{fused_matmul.1} parent=11 // pred_check_branch
        %167 = sbr.rel (%p165) target = $region20
      $region19: #{fused_matmul.1} parent=11 // pred_region
        %p168 = scmp.lt.s32.totalorder %s20, 0
        %s169 = scalar_select %p168, %s20, 0
        %s170 = scalar_lea.vmem %s2, %s169
      $region20: #{fused_matmul.1} parent=11 // pred_fallthru
        _
    $region12: #{fused_matmul.1} parent=5 // pred_fallthru
      _
    %p171 = scmp.lt.s32.totalorder %s9, 16
    // Predicated region
    $region21: #{fused_matmul.1} parent=5 // pred_check
      %p172 = pneg %p171
    $region22: #{fused_matmul.1} parent=5 // pred_check_branch
      %174 = sbr.rel (%p172) target = $region24
    $region23: #{fused_matmul.1} parent=5 // pred_region
      // Predicated region
      $region25: #{fused_matmul.1} parent=23 // pred_check
        %p175 = pneg %p50
      $region26: #{fused_matmul.1} parent=23 // pred_check_branch
        %177 = sbr.rel (%p175) target = $region28
      $region27: #{fused_matmul.1} parent=23 // pred_region
        %s178 = smul.u32 16, %s16
        %s179 = smul.u32 2, %s18
        %p180 = scmp.lt.s32.totalorder %s178, 255
        %s181 = scalar_select %p180, %s178, 255
        %p182 = scmp.lt.s32.totalorder %s179, 1
        %s183 = scalar_select %p182, %s179, 1
        %s184 = smul.addr %s181, 2
        %s185 = sadd.s32 %s183, %s184
        %s186 = smul.addr %s185, 4
        %s187 = scalar_lea.vmem %s0, %s186
        %s188 = smul.u32 16, %s16
        %s189 = smul.u32 2, %s18
      $region28: #{fused_matmul.1} parent=23 // pred_fallthru
        _
    $region24: #{fused_matmul.1} parent=5 // pred_fallthru
      _
    %p190 = scmp.le.s32.totalorder 1, %s9
    %p191 = scmp.lt.s32.totalorder %s9, 17
    %p192 = pnand %p190, %p191
    %p193 = pneg %p192
    // Predicated region
    $region29: #{fused_matmul.1} parent=5 // pred_check
      _
    $region30: #{fused_matmul.1} parent=5 // pred_check_branch
      %195 = sbr.rel (%p192) target = $region32
    $region31: #{fused_matmul.1} parent=5 // pred_region
      %s196 = ssub.s32 %s9, 1
      %s197 = smul.u32 16, %s19
      %s198 = smul.u32 2, %s21
      %p199 = scmp.lt.s32.totalorder %s197, 255
      %s200 = scalar_select %p199, %s197, 255
      %p201 = scmp.lt.s32.totalorder %s198, 1
      %s202 = scalar_select %p201, %s198, 1
      %s203 = smul.addr %s200, 2
      %s204 = sadd.s32 %s202, %s203
      %s205 = smul.addr %s204, 4
      %s206 = scalar_lea.vmem %s0, %s205
      %p207 = pneg %p56
      %p208 = pneg %p53
      %s209 = smul.u32 19, %s21
      %p210 = scmp.lt.s32.totalorder %s209, 18
      %s211 = scalar_select %p210, %s209, 18
      %p212 = scmp.lt.s32.totalorder %s20, 0
      %s213 = scalar_select %p212, %s20, 0
      %s214 = sadd.s32 %s213, %s211
      %s215 = smul.addr %s214, 4
      %s216 = scalar_lea.vmem %s1, %s215
      %p217 = pneg %p84
      %p218 = pneg %p81
      %p219 = scmp.lt.s32.totalorder %s20, 0
      %s220 = scalar_select %p219, %s20, 0
      %s221 = scalar_lea.vmem %s2, %s220
      %p222 = pneg %p110
      %p223 = pneg %p107
      %p224 = pneg %p138
      %p225 = pneg %p135
      %s226 = smul.u32 16, %s19
      %p227 = scmp.lt.s32.totalorder %s226, 255
      %s228 = scalar_select %p227, %s226, 255
      %p229 = scmp.lt.s32.totalorder %s20, 0
      %s230 = scalar_select %p229, %s20, 0
      %s231 = sadd.s32 %s230, %s228
      %s232 = smul.addr %s231, 4
      %s233 = scalar_lea.vmem %s3, %s232
      %s234 = smul.u32 16, %s19
      %s235 = smul.u32 2, %s21
      %p236 = scmp.lt.s32.totalorder %s234, 255
      %s237 = scalar_select %p236, %s234, 255
      %p238 = scmp.lt.s32.totalorder %s235, 1
      %s239 = scalar_select %p238, %s235, 1
      %s240 = smul.addr %s237, 2
      %s241 = sadd.s32 %s239, %s240
      %s242 = smul.addr %s241, 4
      %s243 = scalar_lea.vmem %s0, %s242
      %s244 = smul.u32 16, %s19
      %s245 = smul.u32 2, %s21
      %s246 = smul.u32 19, %s21
      %p247 = scmp.lt.s32.totalorder %s246, 18
      %s248 = scalar_select %p247, %s246, 18
      %p249 = scmp.lt.s32.totalorder %s20, 0
      %s250 = scalar_select %p249, %s20, 0
      %s251 = sadd.s32 %s250, %s248
      %s252 = smul.addr %s251, 4
      %s253 = scalar_lea.vmem %s1, %s252
      %s254 = smul.u32 19, %s21
      %p255 = scmp.lt.s32.totalorder %s20, 0
      %s256 = scalar_select %p255, %s20, 0
      %s257 = scalar_lea.vmem %s2, %s256
      %s258 = smul.u32 16, %s19
      %p259 = scmp.lt.s32.totalorder %s258, 255
      %s260 = scalar_select %p259, %s258, 255
      %p261 = scmp.lt.s32.totalorder %s20, 0
      %s262 = scalar_select %p261, %s20, 0
      %s263 = sadd.s32 %s262, %s260
      %s264 = smul.addr %s263, 4
      %s265 = scalar_lea.vmem %s3, %s264
      %s266 = smul.u32 16, %s19
      %p268 = scmp.eq.s32.totalorder %s21, 0
      // Predicated region
      $region33: #{fused_matmul.1} parent=31 // pred_check
        %p269 = pneg %p268
      $region34: #{fused_matmul.1} parent=31 // pred_check_branch
        %271 = sbr.rel (%p269) target = $region36
      $region35: #{fused_matmul.1} parent=31 // pred_region
        %vm272 = vcmask 523264
        %273 = vst.msk [vmem:[#allocation2] sm:$0xff] %vm272, 0.0
        %274 = vst.msk [vmem:[#allocation2 + $0x8] sm:$0xff] %vm272, 0.0
        %275 = vst.msk [vmem:[#allocation2 + $0x10] sm:$0xff] %vm272, 0.0
        %276 = vst.msk [vmem:[#allocation2 + $0x18] sm:$0xff] %vm272, 0.0
        %277 = vst.msk [vmem:[#allocation2 + $0x20] sm:$0xff] %vm272, 0.0
        %278 = vst.msk [vmem:[#allocation2 + $0x28] sm:$0xff] %vm272, 0.0
        %279 = vst.msk [vmem:[#allocation2 + $0x30] sm:$0xff] %vm272, 0.0
        %280 = vst.msk [vmem:[#allocation2 + $0x38] sm:$0xff] %vm272, 0.0
        %281 = vst.msk [vmem:[#allocation2 + $0x40] sm:$0xff] %vm272, 0.0
        %282 = vst.msk [vmem:[#allocation2 + $0x48] sm:$0xff] %vm272, 0.0
        %283 = vst.msk [vmem:[#allocation2 + $0x50] sm:$0xff] %vm272, 0.0
        %284 = vst.msk [vmem:[#allocation2 + $0x58] sm:$0xff] %vm272, 0.0
        %285 = vst.msk [vmem:[#allocation2 + $0x60] sm:$0xff] %vm272, 0.0
        %286 = vst.msk [vmem:[#allocation2 + $0x68] sm:$0xff] %vm272, 0.0
        %287 = vst.msk [vmem:[#allocation2 + $0x70] sm:$0xff] %vm272, 0.0
        %288 = vst.msk [vmem:[#allocation2 + $0x78] sm:$0xff] %vm272, 0.0
      $region36: #{fused_matmul.1} parent=31 // pred_fallthru
        _
      %v289 = vld [vmem:[#allocation2] sm:$0xff]
      %v290 = vld [vmem:[#allocation2 + $0x8] sm:$0xff]
      %v291 = vld [vmem:[#allocation2 + $0x10] sm:$0xff]
      %v292 = vld [vmem:[#allocation2 + $0x18] sm:$0xff]
      %v293 = vld [vmem:[#allocation2 + $0x20] sm:$0xff]
      %v294 = vld [vmem:[#allocation2 + $0x28] sm:$0xff]
      %v295 = vld [vmem:[#allocation2 + $0x30] sm:$0xff]
      %v296 = vld [vmem:[#allocation2 + $0x38] sm:$0xff]
      %v297 = vld [vmem:[#allocation2 + $0x40] sm:$0xff]
      %v298 = vld [vmem:[#allocation2 + $0x48] sm:$0xff]
      %v299 = vld [vmem:[#allocation2 + $0x50] sm:$0xff]
      %v300 = vld [vmem:[#allocation2 + $0x58] sm:$0xff]
      %v301 = vld [vmem:[#allocation2 + $0x60] sm:$0xff]
      %v302 = vld [vmem:[#allocation2 + $0x68] sm:$0xff]
      %v303 = vld [vmem:[#allocation2 + $0x70] sm:$0xff]
      %v304 = vld [vmem:[#allocation2 + $0x78] sm:$0xff]
      %v305 = vld [vmem:[%s243] sm:$0xff]
      %v306 = vld [vmem:[%s243 + $0x8] sm:$0xff]
      %v307 = vld [vmem:[%s243 + $0x10] sm:$0xff]
      %v308 = vld [vmem:[%s243 + $0x18] sm:$0xff]
      %v309 = vld [vmem:[%s243 + $0x20] sm:$0xff]
      %v310 = vld [vmem:[%s243 + $0x28] sm:$0xff]
      %v311 = vld [vmem:[%s243 + $0x30] sm:$0xff]
      %v312 = vld [vmem:[%s243 + $0x38] sm:$0xff]
      %v313 = vld [vmem:[%s243 + $0x40] sm:$0xff]
      %v314 = vld [vmem:[%s243 + $0x48] sm:$0xff]
      %v315 = vld [vmem:[%s243 + $0x50] sm:$0xff]
      %v316 = vld [vmem:[%s243 + $0x58] sm:$0xff]
      %v317 = vld [vmem:[%s243 + $0x60] sm:$0xff]
      %v318 = vld [vmem:[%s243 + $0x68] sm:$0xff]
      %v319 = vld [vmem:[%s243 + $0x70] sm:$0xff]
      %v320 = vld [vmem:[%s243 + $0x78] sm:$0xff]
      %v321 = vld [vmem:[%s253] sm:$0xf]
      %v322 = vld [vmem:[%s253 + $0x4] sm:$0xf]
      %v323 = vld [vmem:[%s253 + $0x8] sm:$0xf]
      %v324 = vld [vmem:[%s253 + $0xc] sm:$0xf]
      %v325 = vld [vmem:[%s253 + $0x10] sm:$0xf]
      %v326 = vld [vmem:[%s253 + $0x14] sm:$0xf]
      %v327 = vld [vmem:[%s253 + $0x18] sm:$0xf]
      %v328 = vld [vmem:[%s253 + $0x1c] sm:$0xf]
      %v329 = vld [vmem:[%s253 + $0x20] sm:$0xf]
      %v330 = vld [vmem:[%s253 + $0x24] sm:$0xf]
      %v331 = vld [vmem:[%s253 + $0x28] sm:$0xf]
      %v332 = vld [vmem:[%s253 + $0x2c] sm:$0xf]
      %v333 = vld [vmem:[%s253 + $0x30] sm:$0xf]
      %v334 = vld [vmem:[%s253 + $0x34] sm:$0xf]
      %v335 = vld [vmem:[%s253 + $0x38] sm:$0xf]
      %v336 = vld [vmem:[%s253 + $0x3c] sm:$0xf]
      %v337 = vld [vmem:[%s253 + $0x40] sm:$0xf]
      %v338 = vld [vmem:[%s253 + $0x44] sm:$0xf]
      %v339 = vld [vmem:[%s253 + $0x48] sm:$0x3]
      %v356 = vunpack.c.l.b16 %v305
      %v357 = vunpack.c.h.b16 %v305
      %v358 = vunpack.c.l.b16 %v306
      %v359 = vunpack.c.h.b16 %v306
      %v360 = vunpack.c.l.b16 %v307
      %v361 = vunpack.c.h.b16 %v307
      %v362 = vunpack.c.l.b16 %v308
      %v363 = vunpack.c.h.b16 %v308
      %v364 = vunpack.c.l.b16 %v309
      %v365 = vunpack.c.h.b16 %v309
      %v366 = vunpack.c.l.b16 %v310
      %v367 = vunpack.c.h.b16 %v310
      %v368 = vunpack.c.l.b16 %v311
      %v369 = vunpack.c.h.b16 %v311
      %v370 = vunpack.c.l.b16 %v312
      %v371 = vunpack.c.h.b16 %v312
      %v372 = vunpack.c.l.b16 %v313
      %v373 = vunpack.c.h.b16 %v313
      %v374 = vunpack.c.l.b16 %v314
      %v375 = vunpack.c.h.b16 %v314
      %v376 = vunpack.c.l.b16 %v315
      %v377 = vunpack.c.h.b16 %v315
      %v378 = vunpack.c.l.b16 %v316
      %v379 = vunpack.c.h.b16 %v316
      %v380 = vunpack.c.l.b16 %v317
      %v381 = vunpack.c.h.b16 %v317
      %v382 = vunpack.c.l.b16 %v318
      %v383 = vunpack.c.h.b16 %v318
      %v384 = vunpack.c.l.b16 %v319
      %v385 = vunpack.c.h.b16 %v319
      %v386 = vunpack.c.l.b16 %v320
      %v387 = vunpack.c.h.b16 %v320
      %v388 = vpack.c.b16 %v358, %v356
      %v389 = vpack.c.b16 %v359, %v357
      %v390 = vpack.c.b16 %v362, %v360
      %v391 = vpack.c.b16 %v363, %v361
      %v392 = vpack.c.b16 %v366, %v364
      %v393 = vpack.c.b16 %v367, %v365
      %v394 = vpack.c.b16 %v370, %v368
      %v395 = vpack.c.b16 %v371, %v369
      %v396 = vpack.c.b16 %v374, %v372
      %v397 = vpack.c.b16 %v375, %v373
      %v398 = vpack.c.b16 %v378, %v376
      %v399 = vpack.c.b16 %v379, %v377
      %v400 = vpack.c.b16 %v382, %v380
      %v401 = vpack.c.b16 %v383, %v381
      %v402 = vpack.c.b16 %v386, %v384
      %v403 = vpack.c.b16 %v387, %v385
      %v431 = vunpack.c.l.b16 %v321
      %v432 = vunpack.c.l.b16 %v322
      %v433 = vunpack.c.l.b16 %v323
      %v434 = vunpack.c.l.b16 %v324
      %v435 = vunpack.c.l.b16 %v325
      %v436 = vunpack.c.l.b16 %v326
      %v437 = vunpack.c.l.b16 %v327
      %v438 = vunpack.c.l.b16 %v328
      %v439 = vunpack.c.l.b16 %v329
      %v440 = vunpack.c.l.b16 %v330
      %v441 = vunpack.c.l.b16 %v331
      %v442 = vunpack.c.l.b16 %v332
      %v443 = vunpack.c.l.b16 %v333
      %v444 = vunpack.c.l.b16 %v334
      %v445 = vunpack.c.l.b16 %v335
      %v446 = vunpack.c.l.b16 %v336
      %v447 = vunpack.c.l.b16 %v337
      %v448 = vunpack.c.l.b16 %v338
      %v449 = vunpack.c.l.b16 %v339
      %v450 = vpack.c.b16 %v432, %v431
      %v451 = vpack.c.b16 %v434, %v433
      %v452 = vpack.c.b16 %v436, %v435
      %v453 = vpack.c.b16 %v438, %v437
      %v454 = vpack.c.b16 %v440, %v439
      %v455 = vpack.c.b16 %v442, %v441
      %v456 = vpack.c.b16 %v444, %v443
      %v457 = vpack.c.b16 %v446, %v445
      %v458 = vpack.c.b16 %v448, %v447
      %v459 = vpack.c.b16 %v449, %v449
      %vm469 = vcmask 154624
      %v471 = vsel %vm469, %v389, 0
      %v474 = vsel %vm469, %v391, 0
      %v477 = vsel %vm469, %v393, 0
      %v480 = vsel %vm469, %v395, 0
      %v483 = vsel %vm469, %v397, 0
      %v486 = vsel %vm469, %v399, 0
      %v489 = vsel %vm469, %v401, 0
      %v492 = vsel %vm469, %v403, 0
      %vm494 = vcmask 1040384
      %vm495 = vcmask 1041408
      %v496 = vsel %vm494, 4294967295, 65535
      %v497 = vsel %vm495, %v496, 0
      %v499 = vand.u32 %v459, %v497
      %501 = vmatprep.subr.bf16.mxu0 0
      %502 = vmatpush1.bf16.msra.mxu0 %v457
      %503 = vmatprep.subr.bf16.mxu0 0
      %504 = vmatpush1.bf16.msra.mxu0 %v456
      %505 = vmatprep.subr.bf16.mxu0 0
      %506 = vmatpush1.bf16.msra.mxu0 %v455
      %507 = vmatprep.subr.bf16.mxu0 0
      %508 = vmatpush1.bf16.msra.mxu0 %v454
      %509 = vmatprep.subr.bf16.mxu0 0
      %510 = vmatpush1.bf16.msra.mxu0 %v453
      %511 = vmatprep.subr.bf16.mxu0 0
      %512 = vmatpush1.bf16.msra.mxu0 %v452
      %513 = vmatprep.subr.bf16.mxu0 0
      %514 = vmatpush1.bf16.msra.mxu0 %v451
      %515 = vmatprep.subr.bf16.mxu0 0
      %516 = vmatpush1.bf16.msra.mxu0 %v450
      %517 = vmatprep.subr.bf16.mxu0 0
      %518 = vmatpush2.bf16.msra.mxu0 0
      %519 = vmatprep.subr.bf16.mxu0 0
      %520 = vmatpush2.bf16.msra.mxu0 0
      %521 = vmatprep.subr.bf16.mxu0 0
      %522 = vmatpush2.bf16.msra.mxu0 0
      %523 = vmatprep.subr.bf16.mxu0 0
      %524 = vmatpush2.bf16.msra.mxu0 0
      %525 = vmatprep.subr.bf16.mxu0 0
      %526 = vmatpush2.bf16.msra.mxu0 0
      %527 = vmatprep.subr.bf16.mxu0 0
      %528 = vmatpush2.bf16.msra.mxu0 0
      %529 = vmatprep.subr.bf16.mxu0 0
      %530 = vmatpush2.bf16.msra.mxu0 %v499
      %531 = vmatprep.subr.bf16.mxu0 0
      %532 = vmatpush2.bf16.msra.mxu0 %v458
      %533 = vmatprep.mubr.bf16.mxu0 %v471
      %534 = vmatmul.mubr.bf16.gmra.mxu0 %v388
      %v535 = vpop.f32.mrf.mxu0
      %v536 = vadd.f32 0.0, %v535
      %v537 = vpop.f32.mrf.mxu0
      %v538 = vpop.f32.mrf.mxu0
      %v539 = vadd.f32 0.0, %v538
      %v540 = vpop.f32.mrf.mxu0
      %541 = vmatprep.mubr.bf16.mxu0 %v474
      %542 = vmatmul.mubr.bf16.gmra.mxu0 %v390
      %v543 = vpop.f32.mrf.mxu0
      %v544 = vadd.f32 0.0, %v543
      %v545 = vpop.f32.mrf.mxu0
      %v546 = vpop.f32.mrf.mxu0
      %v547 = vadd.f32 0.0, %v546
      %v548 = vpop.f32.mrf.mxu0
      %549 = vmatprep.mubr.bf16.mxu0 %v477
      %550 = vmatmul.mubr.bf16.gmra.mxu0 %v392
      %v551 = vpop.f32.mrf.mxu0
      %v552 = vadd.f32 0.0, %v551
      %v553 = vpop.f32.mrf.mxu0
      %v554 = vpop.f32.mrf.mxu0
      %v555 = vadd.f32 0.0, %v554
      %v556 = vpop.f32.mrf.mxu0
      %557 = vmatprep.mubr.bf16.mxu0 %v480
      %558 = vmatmul.mubr.bf16.gmra.mxu0 %v394
      %v559 = vpop.f32.mrf.mxu0
      %v560 = vadd.f32 0.0, %v559
      %v561 = vpop.f32.mrf.mxu0
      %v562 = vpop.f32.mrf.mxu0
      %v563 = vadd.f32 0.0, %v562
      %v564 = vpop.f32.mrf.mxu0
      %565 = vmatprep.mubr.bf16.mxu0 %v483
      %566 = vmatmul.mubr.bf16.gmra.mxu0 %v396
      %v567 = vpop.f32.mrf.mxu0
      %v568 = vadd.f32 0.0, %v567
      %v569 = vpop.f32.mrf.mxu0
      %v570 = vpop.f32.mrf.mxu0
      %v571 = vadd.f32 0.0, %v570
      %v572 = vpop.f32.mrf.mxu0
      %573 = vmatprep.mubr.bf16.mxu0 %v486
      %574 = vmatmul.mubr.bf16.gmra.mxu0 %v398
      %v575 = vpop.f32.mrf.mxu0
      %v576 = vadd.f32 0.0, %v575
      %v577 = vpop.f32.mrf.mxu0
      %v578 = vpop.f32.mrf.mxu0
      %v579 = vadd.f32 0.0, %v578
      %v580 = vpop.f32.mrf.mxu0
      %581 = vmatprep.mubr.bf16.mxu0 %v489
      %582 = vmatmul.mubr.bf16.gmra.mxu0 %v400
      %v583 = vpop.f32.mrf.mxu0
      %v584 = vadd.f32 0.0, %v583
      %v585 = vpop.f32.mrf.mxu0
      %v586 = vpop.f32.mrf.mxu0
      %v587 = vadd.f32 0.0, %v586
      %v588 = vpop.f32.mrf.mxu0
      %589 = vmatprep.mubr.bf16.mxu0 %v492
      %590 = vmatmul.mubr.bf16.gmra.mxu0 %v402
      %v591 = vpop.f32.mrf.mxu0
      %v592 = vadd.f32 0.0, %v591
      %v593 = vpop.f32.mrf.mxu0
      %v594 = vpop.f32.mrf.mxu0
      %v595 = vadd.f32 0.0, %v594
      %v596 = vpop.f32.mrf.mxu0
      %597 = vdwg.mxu0
      %v598 = vadd.f32 %v289, %v536
      %v599 = vadd.f32 %v290, %v539
      %v600 = vadd.f32 %v291, %v544
      %v601 = vadd.f32 %v292, %v547
      %v602 = vadd.f32 %v293, %v552
      %v603 = vadd.f32 %v294, %v555
      %v604 = vadd.f32 %v295, %v560
      %v605 = vadd.f32 %v296, %v563
      %v606 = vadd.f32 %v297, %v568
      %v607 = vadd.f32 %v298, %v571
      %v608 = vadd.f32 %v299, %v576
      %v609 = vadd.f32 %v300, %v579
      %v610 = vadd.f32 %v301, %v584
      %v611 = vadd.f32 %v302, %v587
      %v612 = vadd.f32 %v303, %v592
      %v613 = vadd.f32 %v304, %v595
      %vm614 = vcmask 523264
      %615 = vst.msk [vmem:[#allocation2] sm:$0xff] %vm614, %v598
      %616 = vst.msk [vmem:[#allocation2 + $0x8] sm:$0xff] %vm614, %v599
      %617 = vst.msk [vmem:[#allocation2 + $0x10] sm:$0xff] %vm614, %v600
      %618 = vst.msk [vmem:[#allocation2 + $0x18] sm:$0xff] %vm614, %v601
      %619 = vst.msk [vmem:[#allocation2 + $0x20] sm:$0xff] %vm614, %v602
      %620 = vst.msk [vmem:[#allocation2 + $0x28] sm:$0xff] %vm614, %v603
      %621 = vst.msk [vmem:[#allocation2 + $0x30] sm:$0xff] %vm614, %v604
      %622 = vst.msk [vmem:[#allocation2 + $0x38] sm:$0xff] %vm614, %v605
      %623 = vst.msk [vmem:[#allocation2 + $0x40] sm:$0xff] %vm614, %v606
      %624 = vst.msk [vmem:[#allocation2 + $0x48] sm:$0xff] %vm614, %v607
      %625 = vst.msk [vmem:[#allocation2 + $0x50] sm:$0xff] %vm614, %v608
      %626 = vst.msk [vmem:[#allocation2 + $0x58] sm:$0xff] %vm614, %v609
      %627 = vst.msk [vmem:[#allocation2 + $0x60] sm:$0xff] %vm614, %v610
      %628 = vst.msk [vmem:[#allocation2 + $0x68] sm:$0xff] %vm614, %v611
      %629 = vst.msk [vmem:[#allocation2 + $0x70] sm:$0xff] %vm614, %v612
      %630 = vst.msk [vmem:[#allocation2 + $0x78] sm:$0xff] %vm614, %v613
      // Predicated region
      $region37: #{fused_matmul.1} parent=31 // pred_check
        %p631 = pneg %p268
      $region38: #{fused_matmul.1} parent=31 // pred_check_branch
        %633 = sbr.rel (%p631) target = $region40
      $region39: #{fused_matmul.1} parent=31 // pred_region
        %v634 = vld [vmem:[#allocation2] sm:$0xff]
        %v635 = vld [vmem:[#allocation2 + $0x8] sm:$0xff]
        %v636 = vld [vmem:[#allocation2 + $0x10] sm:$0xff]
        %v637 = vld [vmem:[#allocation2 + $0x18] sm:$0xff]
        %v638 = vld [vmem:[#allocation2 + $0x20] sm:$0xff]
        %v639 = vld [vmem:[#allocation2 + $0x28] sm:$0xff]
        %v640 = vld [vmem:[#allocation2 + $0x30] sm:$0xff]
        %v641 = vld [vmem:[#allocation2 + $0x38] sm:$0xff]
        %v642 = vld [vmem:[#allocation2 + $0x40] sm:$0xff]
        %v643 = vld [vmem:[#allocation2 + $0x48] sm:$0xff]
        %v644 = vld [vmem:[#allocation2 + $0x50] sm:$0xff]
        %v645 = vld [vmem:[#allocation2 + $0x58] sm:$0xff]
        %v646 = vld [vmem:[#allocation2 + $0x60] sm:$0xff]
        %v647 = vld [vmem:[#allocation2 + $0x68] sm:$0xff]
        %v648 = vld [vmem:[#allocation2 + $0x70] sm:$0xff]
        %v649 = vld [vmem:[#allocation2 + $0x78] sm:$0xff]
        %v650 = vld [vmem:[%s257] sm:$0x1]
        %v652 = vlaneseq
        %v653 = vshrl.u32 %v652, 7
        %v654 = vsub.s32 0, %v653
        %v655 = vrot.slane %v650, %v654
        %v657 = vadd.f32 %v634, %v655
        %v658 = vadd.f32 %v635, %v655
        %v659 = vadd.f32 %v636, %v655
        %v660 = vadd.f32 %v637, %v655
        %v661 = vadd.f32 %v638, %v655
        %v662 = vadd.f32 %v639, %v655
        %v663 = vadd.f32 %v640, %v655
        %v664 = vadd.f32 %v641, %v655
        %v665 = vadd.f32 %v642, %v655
        %v666 = vadd.f32 %v643, %v655
        %v667 = vadd.f32 %v644, %v655
        %v668 = vadd.f32 %v645, %v655
        %v669 = vadd.f32 %v646, %v655
        %v670 = vadd.f32 %v647, %v655
        %v671 = vadd.f32 %v648, %v655
        %v672 = vadd.f32 %v649, %v655
        %v673 = vmax.f32 %v657, 0.0
        %v674 = vmax.f32 %v658, 0.0
        %v675 = vmax.f32 %v659, 0.0
        %v676 = vmax.f32 %v660, 0.0
        %v677 = vmax.f32 %v661, 0.0
        %v678 = vmax.f32 %v662, 0.0
        %v679 = vmax.f32 %v663, 0.0
        %v680 = vmax.f32 %v664, 0.0
        %v681 = vmax.f32 %v665, 0.0
        %v682 = vmax.f32 %v666, 0.0
        %v683 = vmax.f32 %v667, 0.0
        %v684 = vmax.f32 %v668, 0.0
        %v685 = vmax.f32 %v669, 0.0
        %v686 = vmax.f32 %v670, 0.0
        %v687 = vmax.f32 %v671, 0.0
        %v688 = vmax.f32 %v672, 0.0
        %v689 = vpack.c.bf16 %v674, %v673
        %v690 = vpack.c.bf16 %v676, %v675
        %v691 = vpack.c.bf16 %v678, %v677
        %v692 = vpack.c.bf16 %v680, %v679
        %v693 = vpack.c.bf16 %v682, %v681
        %v694 = vpack.c.bf16 %v684, %v683
        %v695 = vpack.c.bf16 %v686, %v685
        %v696 = vpack.c.bf16 %v688, %v687
        %v705 = vunpack.c.l.b16 %v689
        %v706 = vunpack.c.h.b16 %v689
        %v707 = vunpack.c.l.b16 %v690
        %v708 = vunpack.c.h.b16 %v690
        %v709 = vunpack.c.l.b16 %v691
        %v710 = vunpack.c.h.b16 %v691
        %v711 = vunpack.c.l.b16 %v692
        %v712 = vunpack.c.h.b16 %v692
        %v713 = vunpack.c.l.b16 %v693
        %v714 = vunpack.c.h.b16 %v693
        %v715 = vunpack.c.l.b16 %v694
        %v716 = vunpack.c.h.b16 %v694
        %v717 = vunpack.c.l.b16 %v695
        %v718 = vunpack.c.h.b16 %v695
        %v719 = vunpack.c.l.b16 %v696
        %v720 = vunpack.c.h.b16 %v696
        %v721 = vpack.c.b16 %v705, %v705
        %v722 = vpack.c.b16 %v706, %v706
        %v723 = vpack.c.b16 %v707, %v707
        %v724 = vpack.c.b16 %v708, %v708
        %v725 = vpack.c.b16 %v709, %v709
        %v726 = vpack.c.b16 %v710, %v710
        %v727 = vpack.c.b16 %v711, %v711
        %v728 = vpack.c.b16 %v712, %v712
        %v729 = vpack.c.b16 %v713, %v713
        %v730 = vpack.c.b16 %v714, %v714
        %v731 = vpack.c.b16 %v715, %v715
        %v732 = vpack.c.b16 %v716, %v716
        %v733 = vpack.c.b16 %v717, %v717
        %v734 = vpack.c.b16 %v718, %v718
        %v735 = vpack.c.b16 %v719, %v719
        %v736 = vpack.c.b16 %v720, %v720
        %vm753 = vcmask 519168
        %754 = vst.msk [vmem:[%s265] sm:$0xf] %vm753, %v721
        %755 = vst.msk [vmem:[%s265 + $0x4] sm:$0xf] %vm753, %v722
        %756 = vst.msk [vmem:[%s265 + $0x8] sm:$0xf] %vm753, %v723
        %757 = vst.msk [vmem:[%s265 + $0xc] sm:$0xf] %vm753, %v724
        %758 = vst.msk [vmem:[%s265 + $0x10] sm:$0xf] %vm753, %v725
        %759 = vst.msk [vmem:[%s265 + $0x14] sm:$0xf] %vm753, %v726
        %760 = vst.msk [vmem:[%s265 + $0x18] sm:$0xf] %vm753, %v727
        %761 = vst.msk [vmem:[%s265 + $0x1c] sm:$0xf] %vm753, %v728
        %762 = vst.msk [vmem:[%s265 + $0x20] sm:$0xf] %vm753, %v729
        %763 = vst.msk [vmem:[%s265 + $0x24] sm:$0xf] %vm753, %v730
        %764 = vst.msk [vmem:[%s265 + $0x28] sm:$0xf] %vm753, %v731
        %765 = vst.msk [vmem:[%s265 + $0x2c] sm:$0xf] %vm753, %v732
        %766 = vst.msk [vmem:[%s265 + $0x30] sm:$0xf] %vm753, %v733
        %767 = vst.msk [vmem:[%s265 + $0x34] sm:$0xf] %vm753, %v734
        %768 = vst.msk [vmem:[%s265 + $0x38] sm:$0xf] %vm753, %v735
        %769 = vst.msk [vmem:[%s265 + $0x3c] sm:$0xf] %vm753, %v736
      $region40: #{fused_matmul.1} parent=31 // pred_fallthru
        _
      %s770 = smul.u32 16, %s19
      %p771 = scmp.lt.s32.totalorder %s770, 255
      %s772 = scalar_select %p771, %s770, 255
      %p773 = scmp.lt.s32.totalorder %s20, 0
      %s774 = scalar_select %p773, %s20, 0
      %s775 = sadd.s32 %s774, %s772
      %s776 = smul.addr %s775, 4
      %s777 = scalar_lea.vmem %s3, %s776
      // Predicated region
      $region41: #{fused_matmul.1} parent=31 // pred_check
        %p778 = pneg %p135
      $region42: #{fused_matmul.1} parent=31 // pred_check_branch
        %780 = sbr.rel (%p778) target = $region44
      $region43: #{fused_matmul.1} parent=31 // pred_region
        %s781 = smul.u32 16, %s19
      $region44: #{fused_matmul.1} parent=31 // pred_fallthru
        _
    $region32: #{fused_matmul.1} parent=5 // pred_fallthru
      _
    %p782 = scmp.le.s32.totalorder 2, %s9
    // Predicated region
    $region45: #{fused_matmul.1} parent=5 // pred_check
      %p783 = pneg %p782
    $region46: #{fused_matmul.1} parent=5 // pred_check_branch
      %785 = sbr.rel (%p783) target = $region48
    $region47: #{fused_matmul.1} parent=5 // pred_region
      %s786 = ssub.s32 %s9, 2
      // Predicated region
      $region49: #{fused_matmul.1} parent=47 // pred_check
        %p787 = pneg %p141
      $region50: #{fused_matmul.1} parent=47 // pred_check_branch
        %789 = sbr.rel (%p787) target = $region52
      $region51: #{fused_matmul.1} parent=47 // pred_region
        %s790 = smul.u32 16, %s22
        %p791 = scmp.lt.s32.totalorder %s790, 255
        %s792 = scalar_select %p791, %s790, 255
        %p793 = scmp.lt.s32.totalorder %s23, 0
        %s794 = scalar_select %p793, %s23, 0
        %s795 = sadd.s32 %s794, %s792
        %s796 = smul.addr %s795, 4
        %s797 = scalar_lea.vmem %s3, %s796
      $region52: #{fused_matmul.1} parent=47 // pred_fallthru
        _
    $region48: #{fused_matmul.1} parent=5 // pred_fallthru
      _
  $region6: #{fused_matmul.1} parent=0 // loop_footer
    %s13 = sadd.s32 1, %s9
  $region7: #{fused_matmul.1} parent=0 // loop_footer_branch
    %8 = sbr.rel target = $region3
  $region8: #{fused_matmul.1} parent=0 // loop_exit
    _

</llo_original>
